<compile_context>
chip_gen: v5e
topology: v5e:2x2
jax: 0.10.0
libtpu: 0.0.40
codegen_flags: <defaults>
</compile_context>

<pallas_src>
import functools

import jax
import jax.numpy as jnp
from jax.experimental import pallas as pl
from jax.experimental.pallas import tpu as pltpu

EMBED_SIZE = 50
NUM_TYPES = 18                         # len(PokemonType)
VOCAB = NUM_TYPES + 1                  # +1 for padding idx 0
NUM_SLOTS = 6                          # 6 type indices per observation
NUM_SCALAR = 4                         # 4 leading scalar features
OBS_DIM = NUM_SCALAR + NUM_SLOTS       # 10
HIDDEN = 256
IN_FEATURES = NUM_SLOTS * EMBED_SIZE + NUM_SCALAR     # 304

ONEHOT_DIM = NUM_SLOTS * VOCAB         # 114 (lanes 114..117 hold the 4 scalars)
K1 = 128                               # layer-1 input padded to one full lane group


def _round_up(x, m):
    return ((x + m - 1) // m) * m


def _model_kernel(obs_ref, w1_ref, b1_ref, w2_ref, b2_ref, wh_ref, bh_ref, out_ref):
    obs = obs_ref[...]                                   # [tb, 10] f32
    tb = obs.shape[0]
    dot_dtype = w1_ref.dtype                             # f32 or bf16 compute dtype

    # torch `.int()` truncation of the 6 type ids (valid ids are 0..18).
    ids = obs[:, NUM_SCALAR:OBS_DIM].astype(jnp.int32)   # [tb, 6]

    # Fused one-hot over all 6 slots (disjoint, slot-offset lane ranges), built
    # against a single hoisted lane iota.  NOTE: out-of-range ids (>= 19) yield
    # a zero / aliased row instead of raising like nn.Embedding would.
    lane = jax.lax.broadcasted_iota(jnp.int32, (tb, K1), 1)
    match = lane == ids[:, 0:1]
    for s in range(1, NUM_SLOTS):
        match = match | (lane == (ids[:, s:s + 1] + s * VOCAB))
    x = match.astype(dot_dtype)

    # The 4 scalar features live in the spare lanes 114..117 of the folded
    # layer-1 table, so layer 1 is a single [tb,128] @ [128,256] matmul.
    for j in range(NUM_SCALAR):
        x = jnp.where(lane == ONEHOT_DIM + j, obs[:, j:j + 1].astype(dot_dtype), x)

    # Layer 1 (embedding + scalars folded into the weights); bias/tanh in f32.
    h1 = jnp.tanh(jnp.dot(x, w1_ref[...], preferred_element_type=jnp.float32)
                  + b1_ref[...])
    # Layer 2
    h2 = jnp.tanh(jnp.dot(h1.astype(dot_dtype), w2_ref[...],
                          preferred_element_type=jnp.float32) + b2_ref[...])
    # Fused heads: [logits | value | zero-pad] in one lane-dense 128-wide store.
    out = jnp.dot(h2.astype(dot_dtype), wh_ref[...],
                  preferred_element_type=jnp.float32) + bh_ref[...]
    out_ref[...] = out.astype(out_ref.dtype)


def prepare_params(params, num_outputs, compute_dtype=jnp.bfloat16):
    """One-time folding (call once, outside the per-forward path):
       embedding -> layer-1 table, scalar rows -> spare lanes 114..117,
       logits + value heads fused into a single lane-dense 128-wide matrix."""
    embed, w1, b1, w2, b2, wl, bl, wv, bv = params
    head_pad = max(128, _round_up(num_outputs + 1, 128))

    # combined[s*V + v, :] = sum_e embed[v, e] * W1[s*EMBED + e, :]
    w1_emb = w1[:NUM_SLOTS * EMBED_SIZE].reshape(NUM_SLOTS, EMBED_SIZE, HIDDEN)
    combined = jnp.einsum('ve,sef->svf', embed, w1_emb).reshape(ONEHOT_DIM, HIDDEN)
    w1e = jnp.zeros((K1, HIDDEN), jnp.float32)
    w1e = w1e.at[:ONEHOT_DIM].set(combined)
    # Scalar-feature rows of W1 into the spare one-hot lanes.
    w1e = w1e.at[ONEHOT_DIM:ONEHOT_DIM + NUM_SCALAR].set(w1[NUM_SLOTS * EMBED_SIZE:])

    # Fused heads: columns [0:num_outputs] = logits head, column num_outputs = value.
    wh = jnp.zeros((HIDDEN, head_pad), jnp.float32)
    wh = wh.at[:, :num_outputs].set(wl).at[:, num_outputs].set(wv[:, 0])
    bh = jnp.zeros((1, head_pad), jnp.float32)
    bh = bh.at[:, :num_outputs].set(bl.reshape(1, -1)).at[:, num_outputs].set(
        bv.reshape(()))

    cd = compute_dtype
    return (w1e.astype(cd),
            b1.reshape(1, HIDDEN).astype(jnp.float32),   # bias adds / tanh stay f32
            w2.astype(cd),
            b2.reshape(1, HIDDEN).astype(jnp.float32),
            wh.astype(cd),
            bh.astype(jnp.float32))


def model_forward(obs, weights, num_outputs, *, batch_block=1024, out_dtype=jnp.float32):
    w1, b1, w2, b2, wh, bh = weights
    B = obs.shape[0]
    assert obs.shape[1] == OBS_DIM
    head_pad = wh.shape[1]
    sub = 16 if w1.dtype == jnp.bfloat16 else 8          # sublane-clean tiles

    # Tile: multiple of `sub` rows; >= 2 parallel grid steps once B > sub so both
    # v7x TensorCores get work; capped at batch_block (VMEM / step-overhead sweep).
    tb = min(batch_block, max(sub, _round_up(pl.cdiv(B, 2), sub)))
    b_pad = _round_up(B, tb)
    obs_p = obs if b_pad == B else jnp.pad(obs, ((0, b_pad - B), (0, 0)))
    grid = (b_pad // tb,)

    flops = 2 * b_pad * HIDDEN * (K1 + HIDDEN + head_pad)
    bytes_accessed = (int(obs_p.size) * 4
                      + b_pad * head_pad * jnp.dtype(out_dtype).itemsize
                      + sum(int(a.size) * a.dtype.itemsize for a in weights))
    cost = pl.CostEstimate(flops=flops, transcendentals=2 * b_pad * HIDDEN,
                           bytes_accessed=bytes_accessed)

    def resident(a):
        # Weights/biases: one full block, constant index map -> VMEM-resident.
        return pl.BlockSpec(a.shape, lambda i, _nd=a.ndim: (0,) * _nd)

    out = pl.pallas_call(
        _model_kernel,
        out_shape=jax.ShapeDtypeStruct((b_pad, head_pad), out_dtype),
        grid=grid,
        in_specs=[pl.BlockSpec((tb, OBS_DIM), lambda i: (i, 0)),
                  resident(w1), resident(b1), resident(w2), resident(b2),
                  resident(wh), resident(bh)],
        out_specs=pl.BlockSpec((tb, head_pad), lambda i: (i, 0)),
        compiler_params=pltpu.CompilerParams(dimension_semantics=("parallel",)),
        cost_estimate=cost,
    )(obs_p, w1, b1, w2, b2, wh, bh)

    logits = out[:B, :num_outputs]
    value = out[:B, num_outputs]                         # value_function().squeeze(1)
    return logits, value


def init_params(key, num_outputs):
    ks = jax.random.split(key, 9)
    embed = jax.random.normal(ks[0], (VOCAB, EMBED_SIZE), jnp.float32) * 0.1
    embed = embed.at[0].set(0.0)                         # padding_idx=0
    w1 = jax.random.normal(ks[1], (IN_FEATURES, HIDDEN), jnp.float32) * 0.05
    b1 = jax.random.normal(ks[2], (1, HIDDEN), jnp.float32) * 0.01
    w2 = jax.random.normal(ks[3], (HIDDEN, HIDDEN), jnp.float32) * 0.05
    b2 = jax.random.normal(ks[4], (1, HIDDEN), jnp.float32) * 0.01
    wl = jax.random.normal(ks[5], (HIDDEN, num_outputs), jnp.float32) * 0.05
    bl = jax.random.normal(ks[6], (1, num_outputs), jnp.float32) * 0.01
    wv = jax.random.normal(ks[7], (HIDDEN, 1), jnp.float32) * 0.05
    bv = jax.random.normal(ks[8], (1, 1), jnp.float32) * 0.01
    return (embed, w1, b1, w2, b2, wl, bl, wv, bv)


def reference_forward(obs, params):
    """Pure-JAX reference mirroring the PyTorch module (f32 throughout)."""
    (embed, w1, b1, w2, b2, wl, bl, wv, bv) = params
    idx = obs[:, NUM_SCALAR:].astype(jnp.int32)
    emb = embed[idx].reshape(obs.shape[0], -1)           # [B, 300]
    x4 = jnp.concatenate([emb, obs[:, :NUM_SCALAR]], axis=1)
    h = jnp.tanh(x4 @ w1 + b1)
    h = jnp.tanh(h @ w2 + b2)
    return h @ wl + bl, (h @ wv + bv)[:, 0]


if __name__ == "__main__":
    NUM_OUTPUTS = 10
    B = 8

    key = jax.random.PRNGKey(0)
    k_obs_f, k_obs_i, k_params = jax.random.split(key, 3)

    # Observation: 4 scalar floats followed by 6 type indices (stored as floats).
    scalar_feats = jax.random.uniform(k_obs_f, (B, NUM_SCALAR), jnp.float32)
    type_ids = jax.random.randint(k_obs_i, (B, NUM_SLOTS), 0, VOCAB).astype(jnp.float32)
    obs = jnp.concatenate([scalar_feats, type_ids], axis=1)          # [B, 10]

    params = init_params(k_params, NUM_OUTPUTS)
    ref_logits, ref_value = reference_forward(obs, params)

    # f32 compute path (tight tolerance vs. f32 reference).
    weights_f32 = prepare_params(params, NUM_OUTPUTS, compute_dtype=jnp.float32)
    fwd_f32 = jax.jit(functools.partial(model_forward, num_outputs=NUM_OUTPUTS))
    logits, value = fwd_f32(obs, weights_f32)
    jax.block_until_ready((logits, value))
    assert logits.shape == (B, NUM_OUTPUTS) and value.shape == (B,)
    assert jnp.allclose(logits, ref_logits, atol=1e-4, rtol=1e-4)
    assert jnp.allclose(value, ref_value, atol=1e-4, rtol=1e-4)

    # Default bf16 MXU path (native on v5e/v6e/v7x; f32 accumulation, f32 tanh/bias).
    weights_bf16 = prepare_params(params, NUM_OUTPUTS)               # bf16 by default
    fwd_bf16 = jax.jit(functools.partial(model_forward, num_outputs=NUM_OUTPUTS))
    logits_bf, value_bf = fwd_bf16(obs, weights_bf16)
    jax.block_until_ready((logits_bf, value_bf))
    assert jnp.allclose(logits_bf, ref_logits, atol=5e-2, rtol=5e-2)
    assert jnp.allclose(value_bf, ref_value, atol=5e-2, rtol=5e-2)

    print("KERNEL_OK")
</pallas_src>

<mosaic_0001>
module attributes {stable_mosaic.version = 11 : i64} {
  func.func @_model_kernel(%arg0: i32, %arg1: memref<8x10xf32, #tpu.memory_space<vmem>>, %arg2: memref<128x256xf32, #tpu.memory_space<vmem>>, %arg3: memref<1x256xf32, #tpu.memory_space<vmem>>, %arg4: memref<256x256xf32, #tpu.memory_space<vmem>>, %arg5: memref<1x256xf32, #tpu.memory_space<vmem>>, %arg6: memref<256x128xf32, #tpu.memory_space<vmem>>, %arg7: memref<1x128xf32, #tpu.memory_space<vmem>>, %arg8: memref<8x128xf32, #tpu.memory_space<vmem>>) attributes {dimension_semantics = [#tpu.dimension_semantics<parallel>], iteration_bounds = array<i64: 1>, scalar_prefetch = 0 : i64, scratch_operands = 0 : i64, tpu.core_type = #tpu.core_type<tc>, window_params = [{transform_indices = @transform_0, window_bounds = array<i64: 8, 10>}, {pipeline_mode = #tpu.pipeline_mode<synchronous>, transform_indices = @transform_1, window_bounds = array<i64: 128, 256>}, {pipeline_mode = #tpu.pipeline_mode<synchronous>, transform_indices = @transform_2, window_bounds = array<i64: 1, 256>}, {pipeline_mode = #tpu.pipeline_mode<synchronous>, transform_indices = @transform_3, window_bounds = array<i64: 256, 256>}, {pipeline_mode = #tpu.pipeline_mode<synchronous>, transform_indices = @transform_4, window_bounds = array<i64: 1, 256>}, {pipeline_mode = #tpu.pipeline_mode<synchronous>, transform_indices = @transform_5, window_bounds = array<i64: 256, 128>}, {pipeline_mode = #tpu.pipeline_mode<synchronous>, transform_indices = @transform_6, window_bounds = array<i64: 1, 128>}, {transform_indices = @transform_7, window_bounds = array<i64: 8, 128>}]} {
    %c0 = arith.constant 0 : index
    %c0_0 = arith.constant 0 : index
    %0 = vector.load %arg1[%c0, %c0_0] : memref<8x10xf32, #tpu.memory_space<vmem>>, vector<8x10xf32>
    %1 = vector.extract_strided_slice %0 {offsets = [0, 4], sizes = [8, 6], strides = [1, 1]} : vector<8x10xf32> to vector<8x6xf32>
    %2 = arith.fptosi %1 : vector<8x6xf32> to vector<8x6xi32>
    %3 = tpu.iota {dimensions = array<i32: 1>} : vector<8x128xi32>
    %4 = vector.extract_strided_slice %2 {offsets = [0, 0], sizes = [8, 1], strides = [1, 1]} : vector<8x6xi32> to vector<8x1xi32>
    %5 = vector.broadcast %4 : vector<8x1xi32> to vector<8x128xi32>
    %6 = arith.cmpi eq, %3, %5 : vector<8x128xi32>
    %7 = vector.extract_strided_slice %2 {offsets = [0, 1], sizes = [8, 1], strides = [1, 1]} : vector<8x6xi32> to vector<8x1xi32>
    %c19_i32 = arith.constant 19 : i32
    %8 = vector.broadcast %c19_i32 : i32 to vector<8x1xi32>
    %9 = arith.addi %7, %8 : vector<8x1xi32>
    %10 = vector.broadcast %9 : vector<8x1xi32> to vector<8x128xi32>
    %11 = arith.cmpi eq, %3, %10 : vector<8x128xi32>
    %12 = arith.ori %6, %11 : vector<8x128xi1>
    %13 = vector.extract_strided_slice %2 {offsets = [0, 2], sizes = [8, 1], strides = [1, 1]} : vector<8x6xi32> to vector<8x1xi32>
    %c38_i32 = arith.constant 38 : i32
    %14 = vector.broadcast %c38_i32 : i32 to vector<8x1xi32>
    %15 = arith.addi %13, %14 : vector<8x1xi32>
    %16 = vector.broadcast %15 : vector<8x1xi32> to vector<8x128xi32>
    %17 = arith.cmpi eq, %3, %16 : vector<8x128xi32>
    %18 = arith.ori %12, %17 : vector<8x128xi1>
    %19 = vector.extract_strided_slice %2 {offsets = [0, 3], sizes = [8, 1], strides = [1, 1]} : vector<8x6xi32> to vector<8x1xi32>
    %c57_i32 = arith.constant 57 : i32
    %20 = vector.broadcast %c57_i32 : i32 to vector<8x1xi32>
    %21 = arith.addi %19, %20 : vector<8x1xi32>
    %22 = vector.broadcast %21 : vector<8x1xi32> to vector<8x128xi32>
    %23 = arith.cmpi eq, %3, %22 : vector<8x128xi32>
    %24 = arith.ori %18, %23 : vector<8x128xi1>
    %25 = vector.extract_strided_slice %2 {offsets = [0, 4], sizes = [8, 1], strides = [1, 1]} : vector<8x6xi32> to vector<8x1xi32>
    %c76_i32 = arith.constant 76 : i32
    %26 = vector.broadcast %c76_i32 : i32 to vector<8x1xi32>
    %27 = arith.addi %25, %26 : vector<8x1xi32>
    %28 = vector.broadcast %27 : vector<8x1xi32> to vector<8x128xi32>
    %29 = arith.cmpi eq, %3, %28 : vector<8x128xi32>
    %30 = arith.ori %24, %29 : vector<8x128xi1>
    %31 = vector.extract_strided_slice %2 {offsets = [0, 5], sizes = [8, 1], strides = [1, 1]} : vector<8x6xi32> to vector<8x1xi32>
    %c95_i32 = arith.constant 95 : i32
    %32 = vector.broadcast %c95_i32 : i32 to vector<8x1xi32>
    %33 = arith.addi %31, %32 : vector<8x1xi32>
    %34 = vector.broadcast %33 : vector<8x1xi32> to vector<8x128xi32>
    %35 = arith.cmpi eq, %3, %34 : vector<8x128xi32>
    %36 = arith.ori %30, %35 : vector<8x128xi1>
    %37 = arith.extui %36 : vector<8x128xi1> to vector<8x128xi32>
    %38 = arith.sitofp %37 : vector<8x128xi32> to vector<8x128xf32>
    %c114_i32 = arith.constant 114 : i32
    %39 = vector.broadcast %c114_i32 : i32 to vector<8x128xi32>
    %40 = arith.cmpi eq, %3, %39 : vector<8x128xi32>
    %41 = vector.extract_strided_slice %0 {offsets = [0, 0], sizes = [8, 1], strides = [1, 1]} : vector<8x10xf32> to vector<8x1xf32>
    %42 = vector.shape_cast %41 : vector<8x1xf32> to vector<8x1xf32>
    %43 = vector.broadcast %42 : vector<8x1xf32> to vector<8x128xf32>
    %44 = arith.select %40, %43, %38 : vector<8x128xi1>, vector<8x128xf32>
    %c115_i32 = arith.constant 115 : i32
    %45 = vector.broadcast %c115_i32 : i32 to vector<8x128xi32>
    %46 = arith.cmpi eq, %3, %45 : vector<8x128xi32>
    %47 = vector.extract_strided_slice %0 {offsets = [0, 1], sizes = [8, 1], strides = [1, 1]} : vector<8x10xf32> to vector<8x1xf32>
    %48 = vector.shape_cast %47 : vector<8x1xf32> to vector<8x1xf32>
    %49 = vector.broadcast %48 : vector<8x1xf32> to vector<8x128xf32>
    %50 = arith.select %46, %49, %44 : vector<8x128xi1>, vector<8x128xf32>
    %c116_i32 = arith.constant 116 : i32
    %51 = vector.broadcast %c116_i32 : i32 to vector<8x128xi32>
    %52 = arith.cmpi eq, %3, %51 : vector<8x128xi32>
    %53 = vector.extract_strided_slice %0 {offsets = [0, 2], sizes = [8, 1], strides = [1, 1]} : vector<8x10xf32> to vector<8x1xf32>
    %54 = vector.shape_cast %53 : vector<8x1xf32> to vector<8x1xf32>
    %55 = vector.broadcast %54 : vector<8x1xf32> to vector<8x128xf32>
    %56 = arith.select %52, %55, %50 : vector<8x128xi1>, vector<8x128xf32>
    %c117_i32 = arith.constant 117 : i32
    %57 = vector.broadcast %c117_i32 : i32 to vector<8x128xi32>
    %58 = arith.cmpi eq, %3, %57 : vector<8x128xi32>
    %59 = vector.extract_strided_slice %0 {offsets = [0, 3], sizes = [8, 1], strides = [1, 1]} : vector<8x10xf32> to vector<8x1xf32>
    %60 = vector.shape_cast %59 : vector<8x1xf32> to vector<8x1xf32>
    %61 = vector.broadcast %60 : vector<8x1xf32> to vector<8x128xf32>
    %62 = arith.select %58, %61, %56 : vector<8x128xi1>, vector<8x128xf32>
    %c0_1 = arith.constant 0 : index
    %c0_2 = arith.constant 0 : index
    %63 = vector.load %arg2[%c0_1, %c0_2] : memref<128x256xf32, #tpu.memory_space<vmem>>, vector<128x256xf32>
    %cst = arith.constant dense<0.000000e+00> : vector<8x256xf32>
    %64 = tpu.matmul %62, %63, %cst {dimension_numbers = #tpu.dot_dimension_numbers<[1], [0], [0], [1], [0, 0, 1, 1], [], []>} : vector<8x128xf32>, vector<128x256xf32>, vector<8x256xf32> -> vector<8x256xf32>
    %c0_3 = arith.constant 0 : index
    %c0_4 = arith.constant 0 : index
    %65 = vector.load %arg3[%c0_3, %c0_4] : memref<1x256xf32, #tpu.memory_space<vmem>>, vector<1x256xf32>
    %66 = vector.broadcast %65 : vector<1x256xf32> to vector<8x256xf32>
    %67 = arith.addf %64, %66 : vector<8x256xf32>
    %68 = math.tanh %67 : vector<8x256xf32>
    %c0_5 = arith.constant 0 : index
    %c0_6 = arith.constant 0 : index
    %69 = vector.load %arg4[%c0_5, %c0_6] : memref<256x256xf32, #tpu.memory_space<vmem>>, vector<256x256xf32>
    %cst_7 = arith.constant dense<0.000000e+00> : vector<8x256xf32>
    %70 = tpu.matmul %68, %69, %cst_7 {dimension_numbers = #tpu.dot_dimension_numbers<[1], [0], [0], [1], [0, 0, 1, 1], [], []>} : vector<8x256xf32>, vector<256x256xf32>, vector<8x256xf32> -> vector<8x256xf32>
    %c0_8 = arith.constant 0 : index
    %c0_9 = arith.constant 0 : index
    %71 = vector.load %arg5[%c0_8, %c0_9] : memref<1x256xf32, #tpu.memory_space<vmem>>, vector<1x256xf32>
    %72 = vector.broadcast %71 : vector<1x256xf32> to vector<8x256xf32>
    %73 = arith.addf %70, %72 : vector<8x256xf32>
    %74 = math.tanh %73 : vector<8x256xf32>
    %c0_10 = arith.constant 0 : index
    %c0_11 = arith.constant 0 : index
    %75 = vector.load %arg6[%c0_10, %c0_11] : memref<256x128xf32, #tpu.memory_space<vmem>>, vector<256x128xf32>
    %cst_12 = arith.constant dense<0.000000e+00> : vector<8x128xf32>
    %76 = tpu.matmul %74, %75, %cst_12 {dimension_numbers = #tpu.dot_dimension_numbers<[1], [0], [0], [1], [0, 0, 1, 1], [], []>} : vector<8x256xf32>, vector<256x128xf32>, vector<8x128xf32> -> vector<8x128xf32>
    %c0_13 = arith.constant 0 : index
    %c0_14 = arith.constant 0 : index
    %77 = vector.load %arg7[%c0_13, %c0_14] : memref<1x128xf32, #tpu.memory_space<vmem>>, vector<1x128xf32>
    %78 = vector.broadcast %77 : vector<1x128xf32> to vector<8x128xf32>
    %79 = arith.addf %76, %78 : vector<8x128xf32>
    %c0_15 = arith.constant 0 : index
    %c0_16 = arith.constant 0 : index
    %80 = vector.load %arg8[%c0_15, %c0_16] : memref<8x128xf32, #tpu.memory_space<vmem>>, vector<8x128xf32>
    tpu.vector_store %arg8[%c0_15, %c0_16], %79 {strides = array<i32>} : memref<8x128xf32, #tpu.memory_space<vmem>>, vector<8x128xf32>,
    return
  }
  func.func @transform_0(%arg0: i32) -> (i32, i32) {
    %c0_i32 = arith.constant 0 : i32
    %c0_i32_0 = arith.constant 0 : i32
    return %arg0, %c0_i32 : i32, i32
  }
  func.func @transform_1(%arg0: i32) -> (i32, i32) {
    %c0_i32 = arith.constant 0 : i32
    %c0_i32_0 = arith.constant 0 : i32
    %c0_i32_1 = arith.constant 0 : i32
    return %c0_i32, %c0_i32_0 : i32, i32
  }
  func.func @transform_2(%arg0: i32) -> (i32, i32) {
    %c0_i32 = arith.constant 0 : i32
    %c0_i32_0 = arith.constant 0 : i32
    %c0_i32_1 = arith.constant 0 : i32
    return %c0_i32, %c0_i32_0 : i32, i32
  }
  func.func @transform_3(%arg0: i32) -> (i32, i32) {
    %c0_i32 = arith.constant 0 : i32
    %c0_i32_0 = arith.constant 0 : i32
    %c0_i32_1 = arith.constant 0 : i32
    return %c0_i32, %c0_i32_0 : i32, i32
  }
  func.func @transform_4(%arg0: i32) -> (i32, i32) {
    %c0_i32 = arith.constant 0 : i32
    %c0_i32_0 = arith.constant 0 : i32
    %c0_i32_1 = arith.constant 0 : i32
    return %c0_i32, %c0_i32_0 : i32, i32
  }
  func.func @transform_5(%arg0: i32) -> (i32, i32) {
    %c0_i32 = arith.constant 0 : i32
    %c0_i32_0 = arith.constant 0 : i32
    %c0_i32_1 = arith.constant 0 : i32
    return %c0_i32, %c0_i32_0 : i32, i32
  }
  func.func @transform_6(%arg0: i32) -> (i32, i32) {
    %c0_i32 = arith.constant 0 : i32
    %c0_i32_0 = arith.constant 0 : i32
    %c0_i32_1 = arith.constant 0 : i32
    return %c0_i32, %c0_i32_0 : i32, i32
  }
  func.func @transform_7(%arg0: i32) -> (i32, i32) {
    %c0_i32 = arith.constant 0 : i32
    %c0_i32_0 = arith.constant 0 : i32
    return %arg0, %c0_i32 : i32, i32
  }
}

</mosaic_0001>

<llo_original>
// kernel: model_forward.1
$region0: #{model_forward.1}
  #allocation0 [shape = 'u32[]', space=smem, size = 0x4, offset = 0x4, fixed_abs, tag = 'smem constant byte address 0x4 - core index']
  #allocation1 [shape = 'u32[72,128]{1,0:T(1,128)}', space=vmem, size = 0x9000, scoped, tag = 'internal scratch']
  %s0 = inlined_call_operand.hbm [shape: f32[8,10], index: 0, kind: input, shape index: {}]
  %s1 = inlined_call_operand.hbm [shape: f32[128,256], index: 1, kind: input, shape index: {}]
  %s2 = inlined_call_operand.hbm [shape: f32[1,256], index: 2, kind: input, shape index: {}]
  %s3 = inlined_call_operand.hbm [shape: f32[256,256], index: 3, kind: input, shape index: {}]
  %s4 = inlined_call_operand.vmem [shape: f32[1,256], index: 4, kind: input, shape index: {}]
  %s5 = inlined_call_operand.hbm [shape: f32[256,128], index: 5, kind: input, shape index: {}]
  %s6 = inlined_call_operand.vmem [shape: f32[1,128], index: 6, kind: input, shape index: {}]
  %s7 = inlined_call_operand.vmem [shape: f32[8,128], index: 7, kind: output, shape index: {}]
  %s8 = sld [smem:[#allocation0]]
  $region58: #{model_forward.1} parent=0
    _
  %s10 = ssub.s32 1, %s8
  %s11 = scalar_select 0, %s10, %s8
  $region1: #{model_forward.1} parent=0
    #allocation2 [shape = 'u8[4096]{0}', space=vmem, size = 0x1000, scoped, tag = 'input window, operand 0, single buffered']
    #allocation3 [shape = 's32[1]{0}', space=sflag, size = 0x4, scoped, tag = 'scoped memory for model_forward.1']
    #allocation4 [shape = 'u8[131072]{0}', space=vmem, size = 0x20000, scoped, tag = 'input window, operand 1, single buffered']
    #allocation5 [shape = 's32[1]{0}', space=sflag, size = 0x4, scoped, tag = 'scoped memory for model_forward.1']
    #allocation6 [shape = 'u8[1024]{0}', space=vmem, size = 0x400, scoped, tag = 'input window, operand 2, single buffered']
    #allocation7 [shape = 'u8[262144]{0}', space=vmem, size = 0x40000, scoped, tag = 'input window, operand 3, single buffered']
    #allocation8 [shape = 's32[1]{0}', space=sflag, size = 0x4, scoped, tag = 'scoped memory for model_forward.1']
    #allocation9 [shape = 'u8[131072]{0}', space=vmem, size = 0x20000, scoped, tag = 'input window, operand 5, single buffered']
    %12 = vsyncpa [#allocation3], 0
    %13 = vsyncpa [#allocation5], 0
    %14 = vsyncpa [#allocation8], 0
    // Predicated region
    $region2: #{model_forward.1} parent=1 // pred_check
      _
    $region3: #{model_forward.1} parent=1 // pred_check_branch
      %16 = sbr.rel (0) target = $region5
    $region4: #{model_forward.1} parent=1 // pred_region
      %18 = vsyncadd [#allocation3], 0
      %s20 = sshll.u32 %s0, 4
      %s21 = int_to_ptr.hbm [resolvable:$true] %s20
      %s22 = sshll.u32 [#allocation2], 4
      %s23 = int_to_ptr.vmem [resolvable:$true] %s22
      %25 = dma.hbm_to_vmem [thread:$0]  %s21, 128, %s23, [#allocation3]
    $region5: #{model_forward.1} parent=1 // pred_fallthru
      _
    // Predicated region
    $region6: #{model_forward.1} parent=1 // pred_check
      _
    $region7: #{model_forward.1} parent=1 // pred_check_branch
      %27 = sbr.rel (0) target = $region9
    $region8: #{model_forward.1} parent=1 // pred_region
      %29 = vsyncadd [#allocation5], 0
      %s30 = sshll.u32 %s1, 4
      %s31 = int_to_ptr.hbm [resolvable:$true] %s30
      %s32 = sshll.u32 [#allocation4], 4
      %s33 = int_to_ptr.vmem [resolvable:$true] %s32
      %38 = dma.hbm_to_vmem [thread:$0]  %s31, 4096, %s33, [#allocation5], 256, 256, 16
    $region9: #{model_forward.1} parent=1 // pred_fallthru
      _
    // Predicated region
    $region10: #{model_forward.1} parent=1 // pred_check
      _
    $region11: #{model_forward.1} parent=1 // pred_check_branch
      %40 = sbr.rel (0) target = $region13
    $region12: #{model_forward.1} parent=1 // pred_region
      %42 = vsyncadd [#allocation5], 0
      %s44 = sshll.u32 %s2, 4
      %s45 = int_to_ptr.hbm [resolvable:$true] %s44
      %s46 = sshll.u32 [#allocation6], 4
      %s47 = int_to_ptr.vmem [resolvable:$true] %s46
      %49 = dma.hbm_to_vmem [thread:$0]  %s45, 32, %s47, [#allocation5]
    $region13: #{model_forward.1} parent=1 // pred_fallthru
      _
    // Predicated region
    $region14: #{model_forward.1} parent=1 // pred_check
      _
    $region15: #{model_forward.1} parent=1 // pred_check_branch
      %51 = sbr.rel (0) target = $region17
    $region16: #{model_forward.1} parent=1 // pred_region
      %53 = vsyncadd [#allocation8], 0
      %s54 = sshll.u32 %s3, 4
      %s55 = int_to_ptr.hbm [resolvable:$true] %s54
      %s56 = sshll.u32 [#allocation7], 4
      %s57 = int_to_ptr.vmem [resolvable:$true] %s56
      %62 = dma.hbm_to_vmem [thread:$0]  %s55, 8192, %s57, [#allocation8], 256, 256, 16
    $region17: #{model_forward.1} parent=1 // pred_fallthru
      _
    // Predicated region
    $region18: #{model_forward.1} parent=1 // pred_check
      _
    $region19: #{model_forward.1} parent=1 // pred_check_branch
      %64 = sbr.rel (0) target = $region21
    $region20: #{model_forward.1} parent=1 // pred_region
      _
    $region21: #{model_forward.1} parent=1 // pred_fallthru
      _
    // Predicated region
    $region22: #{model_forward.1} parent=1 // pred_check
      _
    $region23: #{model_forward.1} parent=1 // pred_check_branch
      %66 = sbr.rel (0) target = $region25
    $region24: #{model_forward.1} parent=1 // pred_region
      %68 = vsyncadd [#allocation8], 0
      %s69 = sshll.u32 %s5, 4
      %s70 = int_to_ptr.hbm [resolvable:$true] %s69
      %s71 = sshll.u32 [#allocation9], 4
      %s72 = int_to_ptr.vmem [resolvable:$true] %s71
      %77 = dma.hbm_to_vmem [thread:$0]  %s70, 4096, %s72, [#allocation8], 128, 128, 8
    $region25: #{model_forward.1} parent=1 // pred_fallthru
      _
    // Predicated region
    $region26: #{model_forward.1} parent=1 // pred_check
      _
    $region27: #{model_forward.1} parent=1 // pred_check_branch
      %79 = sbr.rel (0) target = $region29
    $region28: #{model_forward.1} parent=1 // pred_region
      _
    $region29: #{model_forward.1} parent=1 // pred_fallthru
      _
    // Predicated region
    $region30: #{model_forward.1} parent=1 // pred_check
      _
    $region31: #{model_forward.1} parent=1 // pred_check_branch
      %81 = sbr.rel (0) target = $region33
    $region32: #{model_forward.1} parent=1 // pred_region
      %83 = dma.done [#allocation3], 128
    $region33: #{model_forward.1} parent=1 // pred_fallthru
      _
    // Predicated region
    $region34: #{model_forward.1} parent=1 // pred_check
      _
    $region35: #{model_forward.1} parent=1 // pred_check_branch
      %85 = sbr.rel (0) target = $region37
    $region36: #{model_forward.1} parent=1 // pred_region
      %87 = dma.done [#allocation5], 4096
    $region37: #{model_forward.1} parent=1 // pred_fallthru
      _
    // Predicated region
    $region38: #{model_forward.1} parent=1 // pred_check
      _
    $region39: #{model_forward.1} parent=1 // pred_check_branch
      %89 = sbr.rel (0) target = $region41
    $region40: #{model_forward.1} parent=1 // pred_region
      %91 = dma.done [#allocation5], 32
    $region41: #{model_forward.1} parent=1 // pred_fallthru
      _
    // Predicated region
    $region42: #{model_forward.1} parent=1 // pred_check
      _
    $region43: #{model_forward.1} parent=1 // pred_check_branch
      %93 = sbr.rel (0) target = $region45
    $region44: #{model_forward.1} parent=1 // pred_region
      %95 = dma.done [#allocation8], 8192
    $region45: #{model_forward.1} parent=1 // pred_fallthru
      _
    // Predicated region
    $region46: #{model_forward.1} parent=1 // pred_check
      _
    $region47: #{model_forward.1} parent=1 // pred_check_branch
      %97 = sbr.rel (0) target = $region49
    $region48: #{model_forward.1} parent=1 // pred_region
      %99 = dma.done [#allocation8], 4096
    $region49: #{model_forward.1} parent=1 // pred_fallthru
      _
    %v100 = vld [vmem:[#allocation2] sm:$0xff]
    %v101 = vcvt.f32.s32.to.zero.pseudo %v100
    %v102 = vlaneseq
    %v103 = vand.u32 %v102, 127
    %104 = vset.pattern.permute.xlu0 4
    %105 = vperm.xlu0 %104, %v101
    %v106 = vpop.permute.xlu0 %105
    %vm107 = vcmp.eq.s32.totalorder %v103, %v106
    %v108 = vadd.s32 %v101, 19
    %109 = vset.pattern.permute.xlu0 5
    %110 = vperm.xlu0 %109, %v108
    %v111 = vpop.permute.xlu0 %110
    %vm112 = vcmp.eq.s32.totalorder %v103, %v111
    %vm113 = vmor %vm107, %vm112
    %v114 = vadd.s32 %v101, 38
    %115 = vset.pattern.permute.xlu0 6
    %116 = vperm.xlu0 %115, %v114
    %v117 = vpop.permute.xlu0 %116
    %vm118 = vcmp.eq.s32.totalorder %v103, %v117
    %vm119 = vmor %vm113, %vm118
    %v120 = vadd.s32 %v101, 57
    %121 = vset.pattern.permute.xlu0 7
    %122 = vperm.xlu0 %121, %v120
    %v123 = vpop.permute.xlu0 %122
    %vm124 = vcmp.eq.s32.totalorder %v103, %v123
    %vm125 = vmor %vm119, %vm124
    %v126 = vadd.s32 %v101, 76
    %127 = vset.pattern.permute.xlu0 8
    %128 = vperm.xlu0 %127, %v126
    %v129 = vpop.permute.xlu0 %128
    %vm130 = vcmp.eq.s32.totalorder %v103, %v129
    %vm131 = vmor %vm125, %vm130
    %v132 = vadd.s32 %v101, 95
    %133 = vset.pattern.permute.xlu0 9
    %134 = vperm.xlu0 %133, %v132
    %v135 = vpop.permute.xlu0 %134
    %vm136 = vcmp.eq.s32.totalorder %v103, %v135
    %vm137 = vmor %vm131, %vm136
    %v138 = vsel %vm137, 1, 0
    %v139 = vcvt.s32.f32 %v138
    %vm140 = vcmp.eq.s32.totalorder %v103, 114
    %142 = vset.pattern.permute.xlu0 0
    %143 = vperm.xlu0 %142, %v100
    %v144 = vpop.permute.xlu0 %143
    %v146 = vsel %vm140, %v144, %v139
    %vm147 = vcmp.eq.s32.totalorder %v103, 115
    %148 = vset.pattern.permute.xlu0 1
    %149 = vperm.xlu0 %148, %v100
    %v150 = vpop.permute.xlu0 %149
    %v152 = vsel %vm147, %v150, %v146
    %vm153 = vcmp.eq.s32.totalorder %v103, 116
    %154 = vset.pattern.permute.xlu0 2
    %155 = vperm.xlu0 %154, %v100
    %v156 = vpop.permute.xlu0 %155
    %v158 = vsel %vm153, %v156, %v152
    %vm159 = vcmp.eq.s32.totalorder %v103, 117
    %160 = vset.pattern.permute.xlu0 3
    %161 = vperm.xlu0 %160, %v100
    %v162 = vpop.permute.xlu0 %161
    %v164 = vsel %vm159, %v162, %v158
    %v165 = vld [vmem:[#allocation4] sm:$0xff]
    %v166 = vld [vmem:[#allocation4 + $0x8] sm:$0xff]
    %v167 = vld [vmem:[#allocation4 + $0x10] sm:$0xff]
    %v168 = vld [vmem:[#allocation4 + $0x18] sm:$0xff]
    %v169 = vld [vmem:[#allocation4 + $0x20] sm:$0xff]
    %v170 = vld [vmem:[#allocation4 + $0x28] sm:$0xff]
    %v171 = vld [vmem:[#allocation4 + $0x30] sm:$0xff]
    %v172 = vld [vmem:[#allocation4 + $0x38] sm:$0xff]
    %v173 = vld [vmem:[#allocation4 + $0x40] sm:$0xff]
    %v174 = vld [vmem:[#allocation4 + $0x48] sm:$0xff]
    %v175 = vld [vmem:[#allocation4 + $0x50] sm:$0xff]
    %v176 = vld [vmem:[#allocation4 + $0x58] sm:$0xff]
    %v177 = vld [vmem:[#allocation4 + $0x60] sm:$0xff]
    %v178 = vld [vmem:[#allocation4 + $0x68] sm:$0xff]
    %v179 = vld [vmem:[#allocation4 + $0x70] sm:$0xff]
    %v180 = vld [vmem:[#allocation4 + $0x78] sm:$0xff]
    %v181 = vld [vmem:[#allocation4 + $0x80] sm:$0xff]
    %v182 = vld [vmem:[#allocation4 + $0x88] sm:$0xff]
    %v183 = vld [vmem:[#allocation4 + $0x90] sm:$0xff]
    %v184 = vld [vmem:[#allocation4 + $0x98] sm:$0xff]
    %v185 = vld [vmem:[#allocation4 + $0xa0] sm:$0xff]
    %v186 = vld [vmem:[#allocation4 + $0xa8] sm:$0xff]
    %v187 = vld [vmem:[#allocation4 + $0xb0] sm:$0xff]
    %v188 = vld [vmem:[#allocation4 + $0xb8] sm:$0xff]
    %v189 = vld [vmem:[#allocation4 + $0xc0] sm:$0xff]
    %v190 = vld [vmem:[#allocation4 + $0xc8] sm:$0xff]
    %v191 = vld [vmem:[#allocation4 + $0xd0] sm:$0xff]
    %v192 = vld [vmem:[#allocation4 + $0xd8] sm:$0xff]
    %v193 = vld [vmem:[#allocation4 + $0xe0] sm:$0xff]
    %v194 = vld [vmem:[#allocation4 + $0xe8] sm:$0xff]
    %v195 = vld [vmem:[#allocation4 + $0xf0] sm:$0xff]
    %v196 = vld [vmem:[#allocation4 + $0xf8] sm:$0xff]
    %v197 = vld [vmem:[#allocation6] sm:$0x3]
    %v199 = vperm.slane %v197, 0
    %v200 = vperm.slane %v197, 1
    %203 = vmatpush.msra.mxu0 %v195
    %204 = vmatpush.msra.mxu0 %v193
    %205 = vmatpush.msra.mxu0 %v191
    %206 = vmatpush.msra.mxu0 %v189
    %207 = vmatpush.msra.mxu0 %v187
    %208 = vmatpush.msra.mxu0 %v185
    %209 = vmatpush.msra.mxu0 %v183
    %210 = vmatpush.msra.mxu0 %v181
    %211 = vmatpush.msra.mxu0 %v179
    %212 = vmatpush.msra.mxu0 %v177
    %213 = vmatpush.msra.mxu0 %v175
    %214 = vmatpush.msra.mxu0 %v173
    %215 = vmatpush.msra.mxu0 %v171
    %216 = vmatpush.msra.mxu0 %v169
    %217 = vmatpush.msra.mxu0 %v167
    %218 = vmatpush.msra.mxu0 %v165
    %219 = vmatmul.f32.gmra.mxu0 %v164
    %v220 = vpop.f32.mrf.mxu0
    %v221 = vadd.f32 %v199, %v220
    %222 = vdwg.mxu0
    %223 = vmatpush.msra.mxu0 %v196
    %224 = vmatpush.msra.mxu0 %v194
    %225 = vmatpush.msra.mxu0 %v192
    %226 = vmatpush.msra.mxu0 %v190
    %227 = vmatpush.msra.mxu0 %v188
    %228 = vmatpush.msra.mxu0 %v186
    %229 = vmatpush.msra.mxu0 %v184
    %230 = vmatpush.msra.mxu0 %v182
    %231 = vmatpush.msra.mxu0 %v180
    %232 = vmatpush.msra.mxu0 %v178
    %233 = vmatpush.msra.mxu0 %v176
    %234 = vmatpush.msra.mxu0 %v174
    %235 = vmatpush.msra.mxu0 %v172
    %236 = vmatpush.msra.mxu0 %v170
    %237 = vmatpush.msra.mxu0 %v168
    %238 = vmatpush.msra.mxu0 %v166
    %239 = vmatmul.f32.gmra.mxu0 %v164
    %v240 = vpop.f32.mrf.mxu0
    %v241 = vadd.f32 %v200, %v240
    %242 = vdwg.mxu0
    %v243 = vtanh.pop %v221
    %v244 = vtanh.pop %v241
    %v245 = vld [vmem:[#allocation7] sm:$0xff]
    %v246 = vld [vmem:[#allocation7 + $0x8] sm:$0xff]
    %v247 = vld [vmem:[#allocation7 + $0x10] sm:$0xff]
    %v248 = vld [vmem:[#allocation7 + $0x18] sm:$0xff]
    %v249 = vld [vmem:[#allocation7 + $0x20] sm:$0xff]
    %v250 = vld [vmem:[#allocation7 + $0x28] sm:$0xff]
    %v251 = vld [vmem:[#allocation7 + $0x30] sm:$0xff]
    %v252 = vld [vmem:[#allocation7 + $0x38] sm:$0xff]
    %v253 = vld [vmem:[#allocation7 + $0x40] sm:$0xff]
    %v254 = vld [vmem:[#allocation7 + $0x48] sm:$0xff]
    %v255 = vld [vmem:[#allocation7 + $0x50] sm:$0xff]
    %v256 = vld [vmem:[#allocation7 + $0x58] sm:$0xff]
    %v257 = vld [vmem:[#allocation7 + $0x60] sm:$0xff]
    %v258 = vld [vmem:[#allocation7 + $0x68] sm:$0xff]
    %v259 = vld [vmem:[#allocation7 + $0x70] sm:$0xff]
    %v260 = vld [vmem:[#allocation7 + $0x78] sm:$0xff]
    %v261 = vld [vmem:[#allocation7 + $0x80] sm:$0xff]
    %v262 = vld [vmem:[#allocation7 + $0x88] sm:$0xff]
    %v263 = vld [vmem:[#allocation7 + $0x90] sm:$0xff]
    %v264 = vld [vmem:[#allocation7 + $0x98] sm:$0xff]
    %v265 = vld [vmem:[#allocation7 + $0xa0] sm:$0xff]
    %v266 = vld [vmem:[#allocation7 + $0xa8] sm:$0xff]
    %v267 = vld [vmem:[#allocation7 + $0xb0] sm:$0xff]
    %v268 = vld [vmem:[#allocation7 + $0xb8] sm:$0xff]
    %v269 = vld [vmem:[#allocation7 + $0xc0] sm:$0xff]
    %v270 = vld [vmem:[#allocation7 + $0xc8] sm:$0xff]
    %v271 = vld [vmem:[#allocation7 + $0xd0] sm:$0xff]
    %v272 = vld [vmem:[#allocation7 + $0xd8] sm:$0xff]
    %v273 = vld [vmem:[#allocation7 + $0xe0] sm:$0xff]
    %v274 = vld [vmem:[#allocation7 + $0xe8] sm:$0xff]
    %v275 = vld [vmem:[#allocation7 + $0xf0] sm:$0xff]
    %v276 = vld [vmem:[#allocation7 + $0xf8] sm:$0xff]
    %v277 = vld [vmem:[#allocation7 + $0x100] sm:$0xff]
    %v278 = vld [vmem:[#allocation7 + $0x108] sm:$0xff]
    %v279 = vld [vmem:[#allocation7 + $0x110] sm:$0xff]
    %v280 = vld [vmem:[#allocation7 + $0x118] sm:$0xff]
    %v281 = vld [vmem:[#allocation7 + $0x120] sm:$0xff]
    %v282 = vld [vmem:[#allocation7 + $0x128] sm:$0xff]
    %v283 = vld [vmem:[#allocation7 + $0x130] sm:$0xff]
    %v284 = vld [vmem:[#allocation7 + $0x138] sm:$0xff]
    %v285 = vld [vmem:[#allocation7 + $0x140] sm:$0xff]
    %v286 = vld [vmem:[#allocation7 + $0x148] sm:$0xff]
    %v287 = vld [vmem:[#allocation7 + $0x150] sm:$0xff]
    %v288 = vld [vmem:[#allocation7 + $0x158] sm:$0xff]
    %v289 = vld [vmem:[#allocation7 + $0x160] sm:$0xff]
    %v290 = vld [vmem:[#allocation7 + $0x168] sm:$0xff]
    %v291 = vld [vmem:[#allocation7 + $0x170] sm:$0xff]
    %v292 = vld [vmem:[#allocation7 + $0x178] sm:$0xff]
    %v293 = vld [vmem:[#allocation7 + $0x180] sm:$0xff]
    %v294 = vld [vmem:[#allocation7 + $0x188] sm:$0xff]
    %v295 = vld [vmem:[#allocation7 + $0x190] sm:$0xff]
    %v296 = vld [vmem:[#allocation7 + $0x198] sm:$0xff]
    %v297 = vld [vmem:[#allocation7 + $0x1a0] sm:$0xff]
    %v298 = vld [vmem:[#allocation7 + $0x1a8] sm:$0xff]
    %v299 = vld [vmem:[#allocation7 + $0x1b0] sm:$0xff]
    %v300 = vld [vmem:[#allocation7 + $0x1b8] sm:$0xff]
    %v301 = vld [vmem:[#allocation7 + $0x1c0] sm:$0xff]
    %v302 = vld [vmem:[#allocation7 + $0x1c8] sm:$0xff]
    %v303 = vld [vmem:[#allocation7 + $0x1d0] sm:$0xff]
    %v304 = vld [vmem:[#allocation7 + $0x1d8] sm:$0xff]
    %v305 = vld [vmem:[#allocation7 + $0x1e0] sm:$0xff]
    %v306 = vld [vmem:[#allocation7 + $0x1e8] sm:$0xff]
    %v307 = vld [vmem:[#allocation7 + $0x1f0] sm:$0xff]
    %v308 = vld [vmem:[#allocation7 + $0x1f8] sm:$0xff]
    %v309 = vld [vmem:[%s4] sm:$0x3]
    %v311 = vperm.slane %v309, 0
    %v312 = vperm.slane %v309, 1
    %315 = vmatpush.msra.mxu0 %v275
    %316 = vmatpush.msra.mxu0 %v273
    %317 = vmatpush.msra.mxu0 %v271
    %318 = vmatpush.msra.mxu0 %v269
    %319 = vmatpush.msra.mxu0 %v267
    %320 = vmatpush.msra.mxu0 %v265
    %321 = vmatpush.msra.mxu0 %v263
    %322 = vmatpush.msra.mxu0 %v261
    %323 = vmatpush.msra.mxu0 %v259
    %324 = vmatpush.msra.mxu0 %v257
    %325 = vmatpush.msra.mxu0 %v255
    %326 = vmatpush.msra.mxu0 %v253
    %327 = vmatpush.msra.mxu0 %v251
    %328 = vmatpush.msra.mxu0 %v249
    %329 = vmatpush.msra.mxu0 %v247
    %330 = vmatpush.msra.mxu0 %v245
    %331 = vmatmul.f32.gmra.mxu0 %v243
    %v332 = vpop.f32.mrf.mxu0
    %v333 = vadd.f32 %v311, %v332
    %334 = vdwg.mxu0
    %335 = vmatpush.msra.mxu0 %v307
    %336 = vmatpush.msra.mxu0 %v305
    %337 = vmatpush.msra.mxu0 %v303
    %338 = vmatpush.msra.mxu0 %v301
    %339 = vmatpush.msra.mxu0 %v299
    %340 = vmatpush.msra.mxu0 %v297
    %341 = vmatpush.msra.mxu0 %v295
    %342 = vmatpush.msra.mxu0 %v293
    %343 = vmatpush.msra.mxu0 %v291
    %344 = vmatpush.msra.mxu0 %v289
    %345 = vmatpush.msra.mxu0 %v287
    %346 = vmatpush.msra.mxu0 %v285
    %347 = vmatpush.msra.mxu0 %v283
    %348 = vmatpush.msra.mxu0 %v281
    %349 = vmatpush.msra.mxu0 %v279
    %350 = vmatpush.msra.mxu0 %v277
    %351 = vmatmul.f32.gmra.mxu0 %v244
    %v352 = vpop.f32.mrf.mxu0
    %v353 = vadd.f32 %v333, %v352
    %354 = vdwg.mxu0
    %355 = vmatpush.msra.mxu0 %v276
    %356 = vmatpush.msra.mxu0 %v274
    %357 = vmatpush.msra.mxu0 %v272
    %358 = vmatpush.msra.mxu0 %v270
    %359 = vmatpush.msra.mxu0 %v268
    %360 = vmatpush.msra.mxu0 %v266
    %361 = vmatpush.msra.mxu0 %v264
    %362 = vmatpush.msra.mxu0 %v262
    %363 = vmatpush.msra.mxu0 %v260
    %364 = vmatpush.msra.mxu0 %v258
    %365 = vmatpush.msra.mxu0 %v256
    %366 = vmatpush.msra.mxu0 %v254
    %367 = vmatpush.msra.mxu0 %v252
    %368 = vmatpush.msra.mxu0 %v250
    %369 = vmatpush.msra.mxu0 %v248
    %370 = vmatpush.msra.mxu0 %v246
    %371 = vmatmul.f32.gmra.mxu0 %v243
    %v372 = vpop.f32.mrf.mxu0
    %v373 = vadd.f32 %v312, %v372
    %374 = vdwg.mxu0
    %375 = vmatpush.msra.mxu0 %v308
    %376 = vmatpush.msra.mxu0 %v306
    %377 = vmatpush.msra.mxu0 %v304
    %378 = vmatpush.msra.mxu0 %v302
    %379 = vmatpush.msra.mxu0 %v300
    %380 = vmatpush.msra.mxu0 %v298
    %381 = vmatpush.msra.mxu0 %v296
    %382 = vmatpush.msra.mxu0 %v294
    %383 = vmatpush.msra.mxu0 %v292
    %384 = vmatpush.msra.mxu0 %v290
    %385 = vmatpush.msra.mxu0 %v288
    %386 = vmatpush.msra.mxu0 %v286
    %387 = vmatpush.msra.mxu0 %v284
    %388 = vmatpush.msra.mxu0 %v282
    %389 = vmatpush.msra.mxu0 %v280
    %390 = vmatpush.msra.mxu0 %v278
    %391 = vmatmul.f32.gmra.mxu0 %v244
    %v392 = vpop.f32.mrf.mxu0
    %v393 = vadd.f32 %v373, %v392
    %394 = vdwg.mxu0
    %v395 = vtanh.pop %v353
    %v396 = vtanh.pop %v393
    %v397 = vld [vmem:[#allocation9] sm:$0xff]
    %v398 = vld [vmem:[#allocation9 + $0x8] sm:$0xff]
    %v399 = vld [vmem:[#allocation9 + $0x10] sm:$0xff]
    %v400 = vld [vmem:[#allocation9 + $0x18] sm:$0xff]
    %v401 = vld [vmem:[#allocation9 + $0x20] sm:$0xff]
    %v402 = vld [vmem:[#allocation9 + $0x28] sm:$0xff]
    %v403 = vld [vmem:[#allocation9 + $0x30] sm:$0xff]
    %v404 = vld [vmem:[#allocation9 + $0x38] sm:$0xff]
    %v405 = vld [vmem:[#allocation9 + $0x40] sm:$0xff]
    %v406 = vld [vmem:[#allocation9 + $0x48] sm:$0xff]
    %v407 = vld [vmem:[#allocation9 + $0x50] sm:$0xff]
    %v408 = vld [vmem:[#allocation9 + $0x58] sm:$0xff]
    %v409 = vld [vmem:[#allocation9 + $0x60] sm:$0xff]
    %v410 = vld [vmem:[#allocation9 + $0x68] sm:$0xff]
    %v411 = vld [vmem:[#allocation9 + $0x70] sm:$0xff]
    %v412 = vld [vmem:[#allocation9 + $0x78] sm:$0xff]
    %v413 = vld [vmem:[#allocation9 + $0x80] sm:$0xff]
    %v414 = vld [vmem:[#allocation9 + $0x88] sm:$0xff]
    %v415 = vld [vmem:[#allocation9 + $0x90] sm:$0xff]
    %v416 = vld [vmem:[#allocation9 + $0x98] sm:$0xff]
    %v417 = vld [vmem:[#allocation9 + $0xa0] sm:$0xff]
    %v418 = vld [vmem:[#allocation9 + $0xa8] sm:$0xff]
    %v419 = vld [vmem:[#allocation9 + $0xb0] sm:$0xff]
    %v420 = vld [vmem:[#allocation9 + $0xb8] sm:$0xff]
    %v421 = vld [vmem:[#allocation9 + $0xc0] sm:$0xff]
    %v422 = vld [vmem:[#allocation9 + $0xc8] sm:$0xff]
    %v423 = vld [vmem:[#allocation9 + $0xd0] sm:$0xff]
    %v424 = vld [vmem:[#allocation9 + $0xd8] sm:$0xff]
    %v425 = vld [vmem:[#allocation9 + $0xe0] sm:$0xff]
    %v426 = vld [vmem:[#allocation9 + $0xe8] sm:$0xff]
    %v427 = vld [vmem:[#allocation9 + $0xf0] sm:$0xff]
    %v428 = vld [vmem:[#allocation9 + $0xf8] sm:$0xff]
    %v429 = vld [vmem:[%s6] sm:$0x1]
    %v431 = vperm.slane %v429, 0
    %433 = vmatpush.msra.mxu0 %v412
    %434 = vmatpush.msra.mxu0 %v411
    %435 = vmatpush.msra.mxu0 %v410
    %436 = vmatpush.msra.mxu0 %v409
    %437 = vmatpush.msra.mxu0 %v408
    %438 = vmatpush.msra.mxu0 %v407
    %439 = vmatpush.msra.mxu0 %v406
    %440 = vmatpush.msra.mxu0 %v405
    %441 = vmatpush.msra.mxu0 %v404
    %442 = vmatpush.msra.mxu0 %v403
    %443 = vmatpush.msra.mxu0 %v402
    %444 = vmatpush.msra.mxu0 %v401
    %445 = vmatpush.msra.mxu0 %v400
    %446 = vmatpush.msra.mxu0 %v399
    %447 = vmatpush.msra.mxu0 %v398
    %448 = vmatpush.msra.mxu0 %v397
    %449 = vmatmul.f32.gmra.mxu0 %v395
    %v450 = vpop.f32.mrf.mxu0
    %v451 = vadd.f32 %v431, %v450
    %452 = vdwg.mxu0
    %453 = vmatpush.msra.mxu0 %v428
    %454 = vmatpush.msra.mxu0 %v427
    %455 = vmatpush.msra.mxu0 %v426
    %456 = vmatpush.msra.mxu0 %v425
    %457 = vmatpush.msra.mxu0 %v424
    %458 = vmatpush.msra.mxu0 %v423
    %459 = vmatpush.msra.mxu0 %v422
    %460 = vmatpush.msra.mxu0 %v421
    %461 = vmatpush.msra.mxu0 %v420
    %462 = vmatpush.msra.mxu0 %v419
    %463 = vmatpush.msra.mxu0 %v418
    %464 = vmatpush.msra.mxu0 %v417
    %465 = vmatpush.msra.mxu0 %v416
    %466 = vmatpush.msra.mxu0 %v415
    %467 = vmatpush.msra.mxu0 %v414
    %468 = vmatpush.msra.mxu0 %v413
    %469 = vmatmul.f32.gmra.mxu0 %v396
    %v470 = vpop.f32.mrf.mxu0
    %v471 = vadd.f32 %v451, %v470
    %472 = vdwg.mxu0
    %473 = vst [vmem:[%s7] sm:$0xff] %v471
    // Predicated region
    $region50: #{model_forward.1} parent=1 // pred_check
      _
    $region51: #{model_forward.1} parent=1 // pred_check_branch
      %475 = sbr.rel (0) target = $region53
    $region52: #{model_forward.1} parent=1 // pred_region
      _
    $region53: #{model_forward.1} parent=1 // pred_fallthru
      _
    // Predicated region
    $region54: #{model_forward.1} parent=1 // pred_check
      _
    $region55: #{model_forward.1} parent=1 // pred_check_branch
      %477 = sbr.rel (0) target = $region57
    $region56: #{model_forward.1} parent=1 // pred_region
      _
    $region57: #{model_forward.1} parent=1 // pred_fallthru
      _
    %478 = vsyncpa [#allocation3], 1
    %479 = vsyncpa [#allocation5], 1
    %480 = vsyncpa [#allocation8], 1

</llo_original>
